<compile_context>
chip_gen: v5e
topology: v5e:2x2
jax: 0.10.0
libtpu: 0.0.40
codegen_flags: <defaults>
</compile_context>

<pallas_src>
import functools

import jax
import jax.numpy as jnp
from jax.experimental import pallas as pl
from jax.experimental.pallas import tpu as pltpu

_EPS = 1e-12           # F.normalize default eps
_EPS2 = _EPS * _EPS    # floor on the sum-of-squares == flooring the norm at eps


def _angle_kernel_f32_out(x_ref, w_ref, xinv_ref, winv_ref, o_ref):
    """f32 output: accumulate directly into the resident output block."""
    k = pl.program_id(2)

    @pl.when(k == 0)
    def _init():
        o_ref[...] = jnp.zeros_like(o_ref)

    o_ref[...] += jnp.dot(x_ref[...], w_ref[...],
                          preferred_element_type=jnp.float32)

    @pl.when(k == pl.num_programs(2) - 1)
    def _finalize():
        cos_theta = o_ref[...] * xinv_ref[...] * winv_ref[...]
        o_ref[...] = jnp.clip(cos_theta, -1.0, 1.0)


def _angle_kernel_acc_scratch(x_ref, w_ref, xinv_ref, winv_ref, o_ref, acc_ref):
    """Non-f32 output: f32 VMEM accumulator, cast on finalize."""
    k = pl.program_id(2)

    @pl.when(k == 0)
    def _init():
        acc_ref[...] = jnp.zeros_like(acc_ref)

    acc_ref[...] += jnp.dot(x_ref[...], w_ref[...],
                            preferred_element_type=jnp.float32)

    @pl.when(k == pl.num_programs(2) - 1)
    def _finalize():
        cos_theta = acc_ref[...] * xinv_ref[...] * winv_ref[...]
        o_ref[...] = jnp.clip(cos_theta, -1.0, 1.0).astype(o_ref.dtype)


def _round_up(v, m):
    return ((v + m - 1) // m) * m


def _pick_tile(dim, max_tile, align):
    """Padding-aware tile choice: prefer the biggest tile whose padded extent
    is within ~12.5% of the minimum achievable padding."""
    dim_p = _round_up(dim, align)
    if dim_p <= max_tile:
        return dim_p
    candidates = list(range(align, max_tile + 1, align))
    pads = {t: _round_up(dim_p, t) for t in candidates}
    min_pad = min(pads.values())
    budget = (min_pad * 9) // 8
    return max(t for t in candidates if pads[t] <= budget)


@functools.partial(jax.jit, static_argnames=("tm", "tn", "tk", "mxu_bf16"))
def angle_simple_linear(x, weight, *, tm=512, tn=512, tk=1024, mxu_bf16=False):
    """cos_theta = clip(normalize(x, 1) @ normalize(weight, 0), -1, 1).

    x: (B, in_features); weight: (in_features, out_features).
    """
    B, In = x.shape
    In_w, Out = weight.shape
    assert In == In_w, (In, In_w)

    out_dtype = jnp.promote_types(x.dtype, weight.dtype)
    if out_dtype not in (jnp.float32, jnp.bfloat16):
        out_dtype = jnp.float32
    out_dtype = jnp.dtype(out_dtype)

    # Wrapper-side inverse norms in f32 (one fused XLA pass); the kernel only
    # applies them as a post-matmul rescale in the finalize step.
    x32 = x.astype(jnp.float32)
    w32 = weight.astype(jnp.float32)
    x_inv = jax.lax.rsqrt(
        jnp.maximum(jnp.sum(x32 * x32, axis=1, keepdims=True), _EPS2))  # (B, 1)
    w_inv = jax.lax.rsqrt(
        jnp.maximum(jnp.sum(w32 * w32, axis=0, keepdims=True), _EPS2))  # (1, Out)

    # Padding-aware, (8,128)-aligned tile selection.
    tm = _pick_tile(B, tm, 8)
    tn = _pick_tile(Out, tn, 128)
    tk = _pick_tile(In, tk, 128)
    Bp, Outp, Inp = _round_up(B, tm), _round_up(Out, tn), _round_up(In, tk)

    # Expose >= 2 blocks on the "parallel" axes when possible (v7x: 2 TCs).
    if (Bp // tm) * (Outp // tn) < 2:
        new_tn = max(128, ((tn // 2) // 128) * 128)
        new_tm = max(8, ((tm // 2) // 8) * 8)
        if new_tn < tn and _round_up(Out, new_tn) // new_tn >= 2:
            tn = new_tn
            Outp = _round_up(Out, tn)
        elif new_tm < tm and _round_up(B, new_tm) // new_tm >= 2:
            tm = new_tm
            Bp = _round_up(B, tm)

    # Optional bf16 operands for v6e/v7x MXU peak (norms stay f32 above).
    xc = x.astype(jnp.bfloat16) if mxu_bf16 else x
    wc = weight.astype(jnp.bfloat16) if mxu_bf16 else weight

    # Zero-padding is exact: zero rows/cols add nothing to the dot product,
    # and padded output rows/cols are sliced away.
    xp = xc if (Bp, Inp) == (B, In) else jnp.pad(xc, ((0, Bp - B), (0, Inp - In)))
    wp = wc if (Inp, Outp) == (In, Out) else jnp.pad(
        wc, ((0, Inp - In), (0, Outp - Out)))
    x_inv_p = x_inv if Bp == B else jnp.pad(x_inv, ((0, Bp - B), (0, 0)))
    w_inv_p = w_inv if Outp == Out else jnp.pad(w_inv, ((0, 0), (0, Outp - Out)))

    grid = (Bp // tm, Outp // tn, Inp // tk)

    direct_acc = out_dtype == jnp.dtype(jnp.float32)
    kernel = _angle_kernel_f32_out if direct_acc else _angle_kernel_acc_scratch
    scratch = [] if direct_acc else [pltpu.VMEM((tm, tn), jnp.float32)]

    # VMEM budget: double-buffered inputs + output (+ optional acc) + headroom.
    xb = jnp.dtype(xp.dtype).itemsize
    wb = jnp.dtype(wp.dtype).itemsize
    ob = out_dtype.itemsize
    vmem_need = (2 * tm * tk * xb + 2 * tk * tn * wb + 2 * tm * tn * ob
                 + 2 * (tm + tn) * 4
                 + (0 if direct_acc else tm * tn * 4))
    vmem_limit = int(min(max(vmem_need + (4 << 20), 16 << 20), 64 << 20))

    out = pl.pallas_call(
        kernel,
        out_shape=jax.ShapeDtypeStruct((Bp, Outp), out_dtype),
        grid_spec=pltpu.PrefetchScalarGridSpec(
            num_scalar_prefetch=0,
            grid=grid,
            in_specs=[
                pl.BlockSpec((tm, tk), lambda i, j, k: (i, k)),
                pl.BlockSpec((tk, tn), lambda i, j, k: (k, j)),
                pl.BlockSpec((tm, 1), lambda i, j, k: (i, 0)),
                pl.BlockSpec((1, tn), lambda i, j, k: (0, j)),
            ],
            out_specs=pl.BlockSpec((tm, tn), lambda i, j, k: (i, j)),
            scratch_shapes=scratch,
        ),
        compiler_params=pltpu.CompilerParams(
            dimension_semantics=("parallel", "parallel", "arbitrary"),
            vmem_limit_bytes=vmem_limit,
        ),
    )(xp, wp, x_inv_p, w_inv_p)

    return out[:B, :Out]


def init_weight(key, in_features, out_features):
    """Deterministic replica of the PyTorch init:
    uniform_(-1, 1).renorm_(2, 1, 1e-05).mul_(1e5)  -> unit-norm columns."""
    w = jax.random.uniform(key, (in_features, out_features),
                           minval=-1.0, maxval=1.0, dtype=jnp.float32)
    col_norm = jnp.sqrt(jnp.sum(w * w, axis=0, keepdims=True))
    scale = jnp.where(col_norm > 1e-5, 1e-5 / (col_norm + 1e-7), 1.0)
    return w * scale * 1e5


if __name__ == "__main__":
    B, IN_FEATURES, OUT_FEATURES = 8, 32, 16

    key = jax.random.PRNGKey(0)
    kx, kw = jax.random.split(key)
    x = jax.random.normal(kx, (B, IN_FEATURES), dtype=jnp.float32)
    w = init_weight(kw, IN_FEATURES, OUT_FEATURES)

    out = angle_simple_linear(x, w)
    out = jax.block_until_ready(out)

    # Pure-JAX reference check (normalize-then-dot).
    xn = x / jnp.maximum(jnp.linalg.norm(x, axis=1, keepdims=True), _EPS)
    wn = w / jnp.maximum(jnp.linalg.norm(w, axis=0, keepdims=True), _EPS)
    ref = jnp.clip(xn @ wn, -1.0, 1.0)
    assert out.shape == (B, OUT_FEATURES)
    err = float(jnp.max(jnp.abs(out - ref)))
    assert err < 3e-5, err   # default MXU precision; see notes for HIGHEST

    print("KERNEL_OK")
</pallas_src>

<mosaic_0001>
module attributes {stable_mosaic.version = 11 : i64} {
  func.func @_angle_kernel_f32_out(%arg0: i32, %arg1: i32, %arg2: i32, %arg3: memref<8x128xf32, #tpu.memory_space<vmem>>, %arg4: memref<128x128xf32, #tpu.memory_space<vmem>>, %arg5: memref<8x1xf32, #tpu.memory_space<vmem>>, %arg6: memref<1x128xf32, #tpu.memory_space<vmem>>, %arg7: memref<8x128xf32, #tpu.memory_space<vmem>>) attributes {dimension_semantics = [#tpu.dimension_semantics<parallel>, #tpu.dimension_semantics<parallel>, #tpu.dimension_semantics<arbitrary>], iteration_bounds = array<i64: 1, 1, 1>, scalar_prefetch = 0 : i64, scratch_operands = 0 : i64, tpu.core_type = #tpu.core_type<tc>, window_params = [{transform_indices = @transform_0, window_bounds = array<i64: 8, 128>}, {transform_indices = @transform_1, window_bounds = array<i64: 128, 128>}, {transform_indices = @transform_2, window_bounds = array<i64: 8, 1>}, {transform_indices = @transform_3, window_bounds = array<i64: 1, 128>}, {transform_indices = @transform_4, window_bounds = array<i64: 8, 128>}]} {
    %c0_i32 = arith.constant 0 : i32
    %0 = arith.cmpi eq, %arg2, %c0_i32 : i32
    %1 = arith.extui %0 : i1 to i32
    %c0_i32_0 = arith.constant 0 : i32
    %2 = arith.cmpi ne, %1, %c0_i32_0 : i32
    scf.if %2 {
      %cst_10 = arith.constant 0.000000e+00 : f32
      %12 = vector.broadcast %cst_10 : f32 to vector<8x128xf32>
      %c0_11 = arith.constant 0 : index
      %c0_12 = arith.constant 0 : index
      %13 = vector.load %arg7[%c0_11, %c0_12] : memref<8x128xf32, #tpu.memory_space<vmem>>, vector<8x128xf32>
      tpu.vector_store %arg7[%c0_11, %c0_12], %12 {strides = array<i32>} : memref<8x128xf32, #tpu.memory_space<vmem>>, vector<8x128xf32>,
    } else {
    }
    %c0 = arith.constant 0 : index
    %c0_1 = arith.constant 0 : index
    %3 = vector.load %arg7[%c0, %c0_1] : memref<8x128xf32, #tpu.memory_space<vmem>>, vector<8x128xf32>
    %c0_2 = arith.constant 0 : index
    %c0_3 = arith.constant 0 : index
    %4 = vector.load %arg3[%c0_2, %c0_3] : memref<8x128xf32, #tpu.memory_space<vmem>>, vector<8x128xf32>
    %c0_4 = arith.constant 0 : index
    %c0_5 = arith.constant 0 : index
    %5 = vector.load %arg4[%c0_4, %c0_5] : memref<128x128xf32, #tpu.memory_space<vmem>>, vector<128x128xf32>
    %cst = arith.constant dense<0.000000e+00> : vector<8x128xf32>
    %6 = tpu.matmul %4, %5, %cst {dimension_numbers = #tpu.dot_dimension_numbers<[1], [0], [0], [1], [0, 0, 1, 1], [], []>} : vector<8x128xf32>, vector<128x128xf32>, vector<8x128xf32> -> vector<8x128xf32>
    %7 = arith.addf %3, %6 : vector<8x128xf32>
    %c0_6 = arith.constant 0 : index
    %c0_7 = arith.constant 0 : index
    %8 = vector.load %arg7[%c0_6, %c0_7] : memref<8x128xf32, #tpu.memory_space<vmem>>, vector<8x128xf32>
    tpu.vector_store %arg7[%c0_6, %c0_7], %7 {strides = array<i32>} : memref<8x128xf32, #tpu.memory_space<vmem>>, vector<8x128xf32>,
    %c0_i32_8 = arith.constant 0 : i32
    %9 = arith.cmpi eq, %arg2, %c0_i32_8 : i32
    %10 = arith.extui %9 : i1 to i32
    %c0_i32_9 = arith.constant 0 : i32
    %11 = arith.cmpi ne, %10, %c0_i32_9 : i32
    scf.if %11 {
      %c0_10 = arith.constant 0 : index
      %c0_11 = arith.constant 0 : index
      %12 = vector.load %arg7[%c0_10, %c0_11] : memref<8x128xf32, #tpu.memory_space<vmem>>, vector<8x128xf32>
      %c0_12 = arith.constant 0 : index
      %c0_13 = arith.constant 0 : index
      %13 = vector.load %arg5[%c0_12, %c0_13] : memref<8x1xf32, #tpu.memory_space<vmem>>, vector<8x1xf32>
      %14 = vector.broadcast %13 : vector<8x1xf32> to vector<8x128xf32>
      %15 = arith.mulf %12, %14 : vector<8x128xf32>
      %c0_14 = arith.constant 0 : index
      %c0_15 = arith.constant 0 : index
      %16 = vector.load %arg6[%c0_14, %c0_15] : memref<1x128xf32, #tpu.memory_space<vmem>>, vector<1x128xf32>
      %17 = vector.broadcast %16 : vector<1x128xf32> to vector<8x128xf32>
      %18 = arith.mulf %15, %17 : vector<8x128xf32>
      %cst_16 = arith.constant -1.000000e+00 : f32
      %cst_17 = arith.constant 1.000000e+00 : f32
      %19 = vector.broadcast %cst_16 : f32 to vector<8x128xf32>
      %20 = arith.maximumf %19, %18 : vector<8x128xf32>
      %21 = vector.broadcast %cst_17 : f32 to vector<8x128xf32>
      %22 = arith.minimumf %21, %20 : vector<8x128xf32>
      %c0_18 = arith.constant 0 : index
      %c0_19 = arith.constant 0 : index
      %23 = vector.load %arg7[%c0_18, %c0_19] : memref<8x128xf32, #tpu.memory_space<vmem>>, vector<8x128xf32>
      tpu.vector_store %arg7[%c0_18, %c0_19], %22 {strides = array<i32>} : memref<8x128xf32, #tpu.memory_space<vmem>>, vector<8x128xf32>,
    } else {
    }
    return
  }
  func.func @transform_0(%arg0: i32, %arg1: i32, %arg2: i32) -> (i32, i32) {
    %c0_i32 = arith.constant 0 : i32
    return %arg0, %arg2 : i32, i32
  }
  func.func @transform_1(%arg0: i32, %arg1: i32, %arg2: i32) -> (i32, i32) {
    %c0_i32 = arith.constant 0 : i32
    return %arg2, %arg1 : i32, i32
  }
  func.func @transform_2(%arg0: i32, %arg1: i32, %arg2: i32) -> (i32, i32) {
    %c0_i32 = arith.constant 0 : i32
    %c0_i32_0 = arith.constant 0 : i32
    return %arg0, %c0_i32 : i32, i32
  }
  func.func @transform_3(%arg0: i32, %arg1: i32, %arg2: i32) -> (i32, i32) {
    %c0_i32 = arith.constant 0 : i32
    %c0_i32_0 = arith.constant 0 : i32
    return %c0_i32, %arg1 : i32, i32
  }
  func.func @transform_4(%arg0: i32, %arg1: i32, %arg2: i32) -> (i32, i32) {
    %c0_i32 = arith.constant 0 : i32
    return %arg0, %arg1 : i32, i32
  }
}

</mosaic_0001>

<llo_original>
// kernel: angle_simple_linear.1
$region0: #{angle_simple_linear.1}
  #allocation0 [shape = 'u32[]', space=smem, size = 0x4, offset = 0x4, fixed_abs, tag = 'smem constant byte address 0x4 - core index']
  #allocation1 [shape = 'u32[72,128]{1,0:T(1,128)}', space=vmem, size = 0x9000, scoped, tag = 'internal scratch']
  %s0 = inlined_call_operand.vmem [shape: f32[8,128], index: 0, kind: input, shape index: {}]
  %s1 = inlined_call_operand.vmem [shape: f32[128,128], index: 1, kind: input, shape index: {}]
  %s2 = inlined_call_operand.vmem [shape: f32[8,1], index: 2, kind: input, shape index: {}]
  %s3 = inlined_call_operand.vmem [shape: f32[1,128], index: 3, kind: input, shape index: {}]
  %s4 = inlined_call_operand.hbm [shape: f32[8,128], index: 4, kind: output, shape index: {}]
  %s5 = sld [smem:[#allocation0]]
  $region34: #{angle_simple_linear.1} parent=0
    _
  %s7 = ssub.s32 1, %s5
  %s8 = scalar_select 0, %s7, %s5
  $region1: #{angle_simple_linear.1} parent=0
    #allocation2 [shape = 'u8[4096]{0}', space=vmem, size = 0x1000, scoped, tag = 'output window, operand 0, single buffered']
    #allocation3 [shape = 's32[1]{0}', space=sflag, size = 0x4, scoped, tag = 'scoped memory for angle_simple_linear.1']
    %9 = vsyncpa [#allocation3], 0
    // Predicated region
    $region2: #{angle_simple_linear.1} parent=1 // pred_check
      _
    $region3: #{angle_simple_linear.1} parent=1 // pred_check_branch
      %11 = sbr.rel (0) target = $region5
    $region4: #{angle_simple_linear.1} parent=1 // pred_region
      _
    $region5: #{angle_simple_linear.1} parent=1 // pred_fallthru
      _
    // Predicated region
    $region6: #{angle_simple_linear.1} parent=1 // pred_check
      _
    $region7: #{angle_simple_linear.1} parent=1 // pred_check_branch
      %13 = sbr.rel (0) target = $region9
    $region8: #{angle_simple_linear.1} parent=1 // pred_region
      _
    $region9: #{angle_simple_linear.1} parent=1 // pred_fallthru
      _
    // Predicated region
    $region10: #{angle_simple_linear.1} parent=1 // pred_check
      _
    $region11: #{angle_simple_linear.1} parent=1 // pred_check_branch
      %15 = sbr.rel (0) target = $region13
    $region12: #{angle_simple_linear.1} parent=1 // pred_region
      _
    $region13: #{angle_simple_linear.1} parent=1 // pred_fallthru
      _
    // Predicated region
    $region14: #{angle_simple_linear.1} parent=1 // pred_check
      _
    $region15: #{angle_simple_linear.1} parent=1 // pred_check_branch
      %17 = sbr.rel (0) target = $region17
    $region16: #{angle_simple_linear.1} parent=1 // pred_region
      _
    $region17: #{angle_simple_linear.1} parent=1 // pred_fallthru
      _
    %p18 = scmp.eq.s32.totalorder 0, 0
    // Predicated region
    $region18: #{angle_simple_linear.1} parent=1 // pred_check
      %p19 = pneg %p18
    $region19: #{angle_simple_linear.1} parent=1 // pred_check_branch
      %21 = sbr.rel (%p19) target = $region21
    $region20: #{angle_simple_linear.1} parent=1 // pred_region
      %22 = vst [vmem:[#allocation2] sm:$0xff] 0.0
    $region21: #{angle_simple_linear.1} parent=1 // pred_fallthru
      _
    %v23 = vld [vmem:[#allocation2] sm:$0xff]
    %v24 = vld [vmem:[%s0] sm:$0xff]
    %v25 = vld [vmem:[%s1] sm:$0xff]
    %v26 = vld [vmem:[%s1 + $0x8] sm:$0xff]
    %v27 = vld [vmem:[%s1 + $0x10] sm:$0xff]
    %v28 = vld [vmem:[%s1 + $0x18] sm:$0xff]
    %v29 = vld [vmem:[%s1 + $0x20] sm:$0xff]
    %v30 = vld [vmem:[%s1 + $0x28] sm:$0xff]
    %v31 = vld [vmem:[%s1 + $0x30] sm:$0xff]
    %v32 = vld [vmem:[%s1 + $0x38] sm:$0xff]
    %v33 = vld [vmem:[%s1 + $0x40] sm:$0xff]
    %v34 = vld [vmem:[%s1 + $0x48] sm:$0xff]
    %v35 = vld [vmem:[%s1 + $0x50] sm:$0xff]
    %v36 = vld [vmem:[%s1 + $0x58] sm:$0xff]
    %v37 = vld [vmem:[%s1 + $0x60] sm:$0xff]
    %v38 = vld [vmem:[%s1 + $0x68] sm:$0xff]
    %v39 = vld [vmem:[%s1 + $0x70] sm:$0xff]
    %v40 = vld [vmem:[%s1 + $0x78] sm:$0xff]
    %41 = vmatpush.msra.mxu0 %v40
    %42 = vmatpush.msra.mxu0 %v39
    %43 = vmatpush.msra.mxu0 %v38
    %44 = vmatpush.msra.mxu0 %v37
    %45 = vmatpush.msra.mxu0 %v36
    %46 = vmatpush.msra.mxu0 %v35
    %47 = vmatpush.msra.mxu0 %v34
    %48 = vmatpush.msra.mxu0 %v33
    %49 = vmatpush.msra.mxu0 %v32
    %50 = vmatpush.msra.mxu0 %v31
    %51 = vmatpush.msra.mxu0 %v30
    %52 = vmatpush.msra.mxu0 %v29
    %53 = vmatpush.msra.mxu0 %v28
    %54 = vmatpush.msra.mxu0 %v27
    %55 = vmatpush.msra.mxu0 %v26
    %56 = vmatpush.msra.mxu0 %v25
    %57 = vmatmul.f32.gmra.mxu0 %v24
    %v58 = vpop.f32.mrf.mxu0
    %v59 = vadd.f32 0.0, %v58
    %60 = vdwg.mxu0
    %v61 = vadd.f32 %v23, %v59
    %62 = vst [vmem:[#allocation2] sm:$0xff] %v61
    // Predicated region
    $region22: #{angle_simple_linear.1} parent=1 // pred_check
      %p63 = pneg %p18
    $region23: #{angle_simple_linear.1} parent=1 // pred_check_branch
      %65 = sbr.rel (%p63) target = $region25
    $region24: #{angle_simple_linear.1} parent=1 // pred_region
      %v66 = vld [vmem:[#allocation2] sm:$0xff]
      %v67 = vld [vmem:[%s2] sm:$0xff]
      %69 = vset.pattern.permute.xlu0 0
      %70 = vperm.xlu0 %69, %v67
      %v71 = vpop.permute.xlu0 %70
      %v73 = vmul.f32 %v66, %v71
      %v74 = vld [vmem:[%s3] sm:$0x1]
      %v76 = vperm.slane %v74, 0
      %v78 = vmul.f32 %v73, %v76
      %v79 = vmax.f32 %v78, -1.0
      %v80 = vmin.f32 %v79, 1.0
      %81 = vst [vmem:[#allocation2] sm:$0xff] %v80
    $region25: #{angle_simple_linear.1} parent=1 // pred_fallthru
      _
    // Predicated region
    $region26: #{angle_simple_linear.1} parent=1 // pred_check
      _
    $region27: #{angle_simple_linear.1} parent=1 // pred_check_branch
      %83 = sbr.rel (0) target = $region29
    $region28: #{angle_simple_linear.1} parent=1 // pred_region
      %85 = vsyncadd [#allocation3], 0
      %s87 = sshll.u32 [#allocation2], 4
      %s88 = int_to_ptr.vmem [resolvable:$true] %s87
      %s89 = sshll.u32 %s4, 4
      %s90 = int_to_ptr.hbm [resolvable:$true] %s89
      %92 = dma.vmem_to_hbm [thread:$0]  %s88, 128, %s90, [#allocation3]
    $region29: #{angle_simple_linear.1} parent=1 // pred_fallthru
      _
    // Predicated region
    $region30: #{angle_simple_linear.1} parent=1 // pred_check
      _
    $region31: #{angle_simple_linear.1} parent=1 // pred_check_branch
      %94 = sbr.rel (0) target = $region33
    $region32: #{angle_simple_linear.1} parent=1 // pred_region
      %96 = dma.done [#allocation3], 128
    $region33: #{angle_simple_linear.1} parent=1 // pred_fallthru
      _
    %97 = vsyncpa [#allocation3], 1

</llo_original>
